<compile_context>
chip_gen: v7x
topology: tpu7x:2x2x1
jax: 0.10.0
libtpu: 0.0.40
codegen_flags: <defaults>
</compile_context>

<pallas_src>
import functools

import jax
import jax.numpy as jnp
from jax import lax
from jax.experimental import pallas as pl
from jax.experimental.pallas import tpu as pltpu


# ----------------------------------------------------------------------------
# Fast path: whole spatial extent of TB images per grid step (no accumulators).
# ----------------------------------------------------------------------------
def _channel_attention_fast_kernel(x_ref, w1t_ref, w2t_ref, out_ref, *, hw):
    # x_ref   : (TB, C, HW)   TB images, full spatial extent
    # w1t_ref : (C, Cr)       conv1 1x1 weight, pre-transposed (resident)
    # w2t_ref : (Cr, C)       conv2 1x1 weight, pre-transposed (resident)
    # out_ref : (TB, C)       lane-dense channel attention
    x = x_ref[...].astype(jnp.float32)                       # (TB, C, HW)
    avg_p = jnp.sum(x, axis=-1) * (1.0 / hw)                  # (TB, C)
    max_p = jnp.max(x, axis=-1)                               # (TB, C)

    pooled = jnp.concatenate([avg_p, max_p], axis=0)          # (2*TB, C)
    w1t = w1t_ref[...].astype(jnp.float32)
    w2t = w2t_ref[...].astype(jnp.float32)

    h = jnp.maximum(jnp.dot(pooled, w1t,
                            preferred_element_type=jnp.float32), 0.0)  # (2*TB, Cr)
    o = jnp.dot(h, w2t, preferred_element_type=jnp.float32)            # (2*TB, C)

    tb = out_ref.shape[0]
    att = jax.nn.sigmoid(o[:tb] + o[tb:])                     # (TB, C)
    out_ref[...] = att.astype(out_ref.dtype)


# ----------------------------------------------------------------------------
# Accumulation path: stream lane-aligned spatial tiles, narrow (C, 128)
# running sum / max accumulators, shared MLP once at finalize.
# ----------------------------------------------------------------------------
def _channel_attention_acc_kernel(x_ref, w1_ref, w2_ref, out_ref,
                                  sum_acc, max_acc, *, hw, tile_hw, num_tiles):
    # x_ref   : (1, C, tile_hw)  spatial tile of one batch element
    # w1_ref  : (Cr, C)          conv1 1x1 weight (resident)
    # w2_ref  : (C, Cr)          conv2 1x1 weight (resident)
    # out_ref : (1, C, 1)        channel attention for this batch element
    # sum_acc : (C, acc_w) f32   narrow running sum   (VMEM scratch)
    # max_acc : (C, acc_w) f32   narrow running max   (VMEM scratch)
    k = pl.program_id(1)
    c_dim, acc_w = sum_acc.shape
    n_chunks = tile_hw // acc_w

    @pl.when(k == 0)
    def _init():
        sum_acc[...] = jnp.zeros_like(sum_acc)
        max_acc[...] = jnp.full_like(max_acc, -jnp.inf)

    def fold_unmasked():
        s = sum_acc[...]
        m = max_acc[...]
        for j in range(n_chunks):  # unrolled lane-group fold, vreg-resident
            chunk = x_ref[0, :, j * acc_w:(j + 1) * acc_w].astype(jnp.float32)
            s = s + chunk
            m = jnp.maximum(m, chunk)
        sum_acc[...] = s
        max_acc[...] = m

    ragged = (hw % tile_hw) != 0
    if not ragged:
        fold_unmasked()
    else:
        last = num_tiles - 1

        @pl.when(k != last)
        def _full_steps():
            fold_unmasked()

        @pl.when(k == last)
        def _masked_last_step():
            # Only the final tile can be partial; all offsets are static here.
            base = last * tile_hw
            s = sum_acc[...]
            m = max_acc[...]
            for j in range(n_chunks):
                start = base + j * acc_w
                if start >= hw:
                    continue  # chunk entirely past the true extent: skip load
                chunk = x_ref[0, :, j * acc_w:(j + 1) * acc_w].astype(jnp.float32)
                if start + acc_w <= hw:
                    s = s + chunk
                    m = jnp.maximum(m, chunk)
                else:
                    lane = lax.broadcasted_iota(jnp.int32, (c_dim, acc_w), 1)
                    valid = (start + lane) < hw
                    s = s + jnp.where(valid, chunk, 0.0)
                    m = jnp.maximum(m, jnp.where(valid, chunk, -jnp.inf))
            sum_acc[...] = s
            max_acc[...] = m

    @pl.when(k == num_tiles - 1)
    def _finalize():
        # Single narrow cross-lane (XLU) reduction per batch element.
        avg_p = jnp.sum(sum_acc[...], axis=-1, keepdims=True) * (1.0 / hw)  # (C, 1)
        max_p = jnp.max(max_acc[...], axis=-1, keepdims=True)               # (C, 1)

        w1 = w1_ref[...].astype(jnp.float32)  # (Cr, C)
        w2 = w2_ref[...].astype(jnp.float32)  # (C, Cr)

        p = jnp.concatenate([avg_p, max_p], axis=-1)                         # (C, 2)
        h = jnp.maximum(jnp.dot(w1, p, preferred_element_type=jnp.float32), 0.0)
        o = jnp.dot(w2, h, preferred_element_type=jnp.float32)               # (C, 2)
        att = jax.nn.sigmoid(o[:, 0:1] + o[:, 1:2])                          # (C, 1)
        out_ref[...] = att[None].astype(out_ref.dtype)                       # (1, C, 1)


# ----------------------------------------------------------------------------
# Wrapper
# ----------------------------------------------------------------------------
def _vmem_limit_bytes():
    """Half of physical VMEM: ~32 MiB on v7x, up to 64 MiB on v5e/v6e."""
    phys = None
    try:
        phys = getattr(pltpu.get_tpu_info(), "vmem_capacity_bytes", None)
    except Exception:
        phys = None
    if not phys:
        phys = 64 * 1024 * 1024  # conservative (v7x physical size)
    return min(phys // 2, 64 * 1024 * 1024)


def _pick_tile_hw(hw, c, itemsize, input_budget_bytes):
    """Byte-targeted lane-aligned HW tile (~2 MiB per DMA slab)."""
    if hw < 128:
        return hw  # single full-extent tile (block == full array dim)
    hw_full_tiles = (hw // 128) * 128  # keep block <= array extent
    target_bytes = 2 * 1024 * 1024
    tile = (target_bytes // (c * itemsize)) // 128 * 128
    tile = max(128, min(int(tile), hw_full_tiles))
    # Double-buffered input tile must fit the budget.
    while tile > 128 and 2 * c * tile * itemsize > input_budget_bytes:
        tile -= 128
    return tile


def channel_attention(x, w1, w2, *, tile_hw=None, allow_fast_path=True):
    """x: (B, C, H, W); w1: (C//r, C); w2: (C, C//r). Returns (B, C, 1, 1)."""
    B, C, H, W = x.shape
    Cr = w1.shape[0]
    HW = H * W
    itemsize = x.dtype.itemsize

    x_flat = x.reshape(B, C, HW)

    vmem_limit = _vmem_limit_bytes()
    input_budget = (vmem_limit * 3) // 4

    per_image_bytes = C * HW * itemsize
    cap = input_budget // max(1, 2 * per_image_bytes)  # images per double-buffered slab

    # -------------------- fast path (HW fits in one slab) --------------------
    use_fast = (allow_fast_path and tile_hw is None and cap >= 1
                and (cap >= B or cap >= 8))
    if use_fast:
        tb = B if cap >= B else (cap // 8) * 8   # tb == B or a multiple of 8
        num_b_tiles = pl.cdiv(B, tb)

        cost = pl.CostEstimate(
            flops=3 * B * C * HW + 8 * B * C * Cr,
            transcendentals=B * C,
            bytes_accessed=(x_flat.size * itemsize
                            + (w1.size + w2.size) * w1.dtype.itemsize
                            + B * C * itemsize),
        )
        kernel = functools.partial(_channel_attention_fast_kernel, hw=HW)
        out = pl.pallas_call(
            kernel,
            out_shape=jax.ShapeDtypeStruct((B, C), x.dtype),
            grid_spec=pltpu.PrefetchScalarGridSpec(
                num_scalar_prefetch=0,
                grid=(num_b_tiles,),
                in_specs=[
                    pl.BlockSpec((tb, C, HW), lambda b: (b, 0, 0)),
                    pl.BlockSpec((C, Cr), lambda b: (0, 0)),   # resident weight
                    pl.BlockSpec((Cr, C), lambda b: (0, 0)),   # resident weight
                ],
                out_specs=pl.BlockSpec((tb, C), lambda b: (b, 0)),
            ),
            compiler_params=pltpu.CompilerParams(
                dimension_semantics=("parallel",),
                vmem_limit_bytes=vmem_limit,
            ),
            cost_estimate=cost,
        )(x_flat, jnp.transpose(w1), jnp.transpose(w2))
        return out.reshape(B, C, 1, 1)

    # -------------------- accumulation path (streamed HW tiles) --------------
    if tile_hw is None:
        tile_hw = _pick_tile_hw(HW, C, itemsize, input_budget)
    num_hw_tiles = pl.cdiv(HW, tile_hw)
    acc_w = min(128, tile_hw)

    cost = pl.CostEstimate(
        flops=3 * B * C * HW + 8 * B * C * Cr,
        transcendentals=B * C,
        bytes_accessed=(x_flat.size * itemsize
                        + (w1.size + w2.size) * w1.dtype.itemsize
                        + B * C * itemsize),
    )
    kernel = functools.partial(_channel_attention_acc_kernel,
                               hw=HW, tile_hw=tile_hw, num_tiles=num_hw_tiles)
    out = pl.pallas_call(
        kernel,
        out_shape=jax.ShapeDtypeStruct((B, C, 1), x.dtype),
        grid_spec=pltpu.PrefetchScalarGridSpec(
            num_scalar_prefetch=0,
            grid=(B, num_hw_tiles),                          # reduction axis last
            in_specs=[
                pl.BlockSpec((1, C, tile_hw), lambda b, k: (b, 0, k)),
                pl.BlockSpec((Cr, C), lambda b, k: (0, 0)),  # resident weight
                pl.BlockSpec((C, Cr), lambda b, k: (0, 0)),  # resident weight
            ],
            out_specs=pl.BlockSpec((1, C, 1), lambda b, k: (b, 0, 0)),
            scratch_shapes=[
                pltpu.VMEM((C, acc_w), jnp.float32),         # narrow running sum
                pltpu.VMEM((C, acc_w), jnp.float32),         # narrow running max
            ],
        ),
        compiler_params=pltpu.CompilerParams(
            dimension_semantics=("parallel", "arbitrary"),
            vmem_limit_bytes=vmem_limit,
        ),
        cost_estimate=cost,
    )(x_flat, w1, w2)
    return out.reshape(B, C, 1, 1)


# ----------------------------------------------------------------------------
# Pure-JAX reference replicating the PyTorch forward.
# ----------------------------------------------------------------------------
def reference(x, w1, w2):
    avg = jnp.mean(x, axis=(2, 3))  # (B, C)
    mx = jnp.max(x, axis=(2, 3))    # (B, C)

    def mlp(p):
        h = jnp.maximum(jnp.dot(p, w1.T, precision=lax.Precision.HIGHEST), 0.0)
        return jnp.dot(h, w2.T, precision=lax.Precision.HIGHEST)

    return jax.nn.sigmoid(mlp(avg) + mlp(mx))[:, :, None, None]


if __name__ == "__main__":
    key = jax.random.PRNGKey(0)
    B, C, reduction = 2, 32, 16
    Cr = C // reduction

    k1, k2, kx1, kx2, kx3, kx4 = jax.random.split(key, 6)
    # Synthetic Conv2d(C, Cr, 1) / Conv2d(Cr, C, 1) weights (bias=False).
    w1 = jax.random.normal(k1, (Cr, C), dtype=jnp.float32) * 0.1
    w2 = jax.random.normal(k2, (C, Cr), dtype=jnp.float32) * 0.1

    tol = dict(atol=1e-4, rtol=1e-4)

    # Case 1: fast single-slab path, lane-aligned HW.
    x1 = jax.random.normal(kx1, (B, C, 16, 16), dtype=jnp.float32)
    out1 = jax.block_until_ready(channel_attention(x1, w1, w2))
    assert out1.shape == (B, C, 1, 1)
    assert jnp.allclose(out1, reference(x1, w1, w2), **tol)

    # Case 2: fast path with ragged HW (7*9 = 63, block == full array extent).
    x2 = jax.random.normal(kx2, (B, C, 7, 9), dtype=jnp.float32)
    out2 = jax.block_until_ready(channel_attention(x2, w1, w2))
    assert out2.shape == (B, C, 1, 1)
    assert jnp.allclose(out2, reference(x2, w1, w2), **tol)

    # Case 3: streamed accumulation path, HW divisible by the tile (no mask).
    x3 = jax.random.normal(kx3, (B, C, 16, 16), dtype=jnp.float32)
    out3 = jax.block_until_ready(
        channel_attention(x3, w1, w2, tile_hw=128, allow_fast_path=False))
    assert jnp.allclose(out3, reference(x3, w1, w2), **tol)

    # Case 4: streamed accumulation path with a ragged (masked) last tile.
    x4 = jax.random.normal(kx4, (B, C, 10, 15), dtype=jnp.float32)  # HW = 150
    out4 = jax.block_until_ready(
        channel_attention(x4, w1, w2, tile_hw=128, allow_fast_path=False))
    assert jnp.allclose(out4, reference(x4, w1, w2), **tol)

    print("KERNEL_OK")
</pallas_src>

<mosaic_0001>
module attributes {stable_mosaic.version = 11 : i64} {
  func.func @_channel_attention_fast_kernel(%arg0: i32, %arg1: memref<2x32x256xf32, #tpu.memory_space<vmem>>, %arg2: memref<32x2xf32, #tpu.memory_space<vmem>>, %arg3: memref<2x32xf32, #tpu.memory_space<vmem>>, %arg4: memref<2x32xf32, #tpu.memory_space<vmem>>) attributes {dimension_semantics = [#tpu.dimension_semantics<parallel>], iteration_bounds = array<i64: 1>, scalar_prefetch = 0 : i64, scratch_operands = 0 : i64, tpu.core_type = #tpu.core_type<tc>, window_params = [{transform_indices = @transform_0, window_bounds = array<i64: 2, 32, 256>}, {pipeline_mode = #tpu.pipeline_mode<synchronous>, transform_indices = @transform_1, window_bounds = array<i64: 32, 2>}, {pipeline_mode = #tpu.pipeline_mode<synchronous>, transform_indices = @transform_2, window_bounds = array<i64: 2, 32>}, {transform_indices = @transform_3, window_bounds = array<i64: 2, 32>}]} {
    %c0 = arith.constant 0 : index
    %c0_0 = arith.constant 0 : index
    %c0_1 = arith.constant 0 : index
    %0 = vector.load %arg1[%c0, %c0_0, %c0_1] : memref<2x32x256xf32, #tpu.memory_space<vmem>>, vector<2x32x256xf32>
    %cst = arith.constant dense<0.000000e+00> : vector<2x32xf32>
    %1 = vector.multi_reduction <add>, %0, %cst [2] : vector<2x32x256xf32> to vector<2x32xf32>
    %cst_2 = arith.constant 3.906250e-03 : f32
    %2 = vector.broadcast %cst_2 : f32 to vector<2x32xf32>
    %3 = arith.mulf %1, %2 : vector<2x32xf32>
    %cst_3 = arith.constant dense<0xFF800000> : vector<2x32xf32>
    %4 = vector.multi_reduction <maximumf>, %0, %cst_3 [2] : vector<2x32x256xf32> to vector<2x32xf32>
    %5 = tpu.concatenate %3, %4 in 0 : vector<2x32xf32>, vector<2x32xf32> -> vector<4x32xf32>
    %c0_4 = arith.constant 0 : index
    %c0_5 = arith.constant 0 : index
    %6 = vector.load %arg2[%c0_4, %c0_5] : memref<32x2xf32, #tpu.memory_space<vmem>>, vector<32x2xf32>
    %c0_6 = arith.constant 0 : index
    %c0_7 = arith.constant 0 : index
    %7 = vector.load %arg3[%c0_6, %c0_7] : memref<2x32xf32, #tpu.memory_space<vmem>>, vector<2x32xf32>
    %cst_8 = arith.constant dense<0.000000e+00> : vector<4x2xf32>
    %8 = tpu.matmul %5, %6, %cst_8 {dimension_numbers = #tpu.dot_dimension_numbers<[1], [0], [0], [1], [0, 0, 1, 1], [], []>} : vector<4x32xf32>, vector<32x2xf32>, vector<4x2xf32> -> vector<4x2xf32>
    %cst_9 = arith.constant 0.000000e+00 : f32
    %9 = vector.broadcast %cst_9 : f32 to vector<4x2xf32>
    %10 = arith.maximumf %8, %9 : vector<4x2xf32>
    %cst_10 = arith.constant dense<0.000000e+00> : vector<4x32xf32>
    %11 = tpu.matmul %10, %7, %cst_10 {dimension_numbers = #tpu.dot_dimension_numbers<[1], [0], [0], [1], [0, 0, 1, 1], [], []>} : vector<4x2xf32>, vector<2x32xf32>, vector<4x32xf32> -> vector<4x32xf32>
    %12 = vector.extract_strided_slice %11 {offsets = [0, 0], sizes = [2, 32], strides = [1, 1]} : vector<4x32xf32> to vector<2x32xf32>
    %13 = vector.extract_strided_slice %11 {offsets = [2, 0], sizes = [2, 32], strides = [1, 1]} : vector<4x32xf32> to vector<2x32xf32>
    %14 = arith.addf %12, %13 : vector<2x32xf32>
    %15 = arith.negf %14 : vector<2x32xf32>
    %16 = math.exp %15 : vector<2x32xf32>
    %cst_11 = arith.constant 1.000000e+00 : f32
    %17 = vector.broadcast %cst_11 : f32 to vector<2x32xf32>
    %18 = arith.addf %17, %16 : vector<2x32xf32>
    %19 = arith.divf %17, %18 : vector<2x32xf32>
    %c0_12 = arith.constant 0 : index
    %c0_13 = arith.constant 0 : index
    %20 = vector.load %arg4[%c0_12, %c0_13] : memref<2x32xf32, #tpu.memory_space<vmem>>, vector<2x32xf32>
    tpu.vector_store %arg4[%c0_12, %c0_13], %19 {strides = array<i32>} : memref<2x32xf32, #tpu.memory_space<vmem>>, vector<2x32xf32>,
    return
  }
  func.func @transform_0(%arg0: i32) -> (i32, i32, i32) {
    %c0_i32 = arith.constant 0 : i32
    %c0_i32_0 = arith.constant 0 : i32
    %c0_i32_1 = arith.constant 0 : i32
    return %arg0, %c0_i32, %c0_i32_0 : i32, i32, i32
  }
  func.func @transform_1(%arg0: i32) -> (i32, i32) {
    %c0_i32 = arith.constant 0 : i32
    %c0_i32_0 = arith.constant 0 : i32
    %c0_i32_1 = arith.constant 0 : i32
    return %c0_i32, %c0_i32_0 : i32, i32
  }
  func.func @transform_2(%arg0: i32) -> (i32, i32) {
    %c0_i32 = arith.constant 0 : i32
    %c0_i32_0 = arith.constant 0 : i32
    %c0_i32_1 = arith.constant 0 : i32
    return %c0_i32, %c0_i32_0 : i32, i32
  }
  func.func @transform_3(%arg0: i32) -> (i32, i32) {
    %c0_i32 = arith.constant 0 : i32
    %c0_i32_0 = arith.constant 0 : i32
    return %arg0, %c0_i32 : i32, i32
  }
}

</mosaic_0001>

<llo_original>
// kernel: tpu_custom_call.1
$region0: #{tpu_custom_call.1}
  #allocation0 [shape = 'u32[]', space=smem, size = 0x4, offset = 0x4, fixed_abs, tag = 'smem constant byte address 0x4 - core index']
  #allocation1 [shape = 'u32[144,128]{1,0:T(1,128)}', space=vmem, size = 0x12000, scoped, tag = 'internal scratch']
  %s0 = inlined_call_operand.hbm [shape: f32[2,32,256], index: 0, kind: input, shape index: {}]
  %s1 = inlined_call_operand.vmem [shape: f32[32,2], index: 1, kind: input, shape index: {}]
  %s2 = inlined_call_operand.vmem [shape: f32[2,32], index: 2, kind: input, shape index: {}]
  %s3 = inlined_call_operand.hbm [shape: f32[2,32], index: 3, kind: output, shape index: {}]
  %s4 = sld [smem:[#allocation0]]
  $region26: #{tpu_custom_call.1} parent=0
    _
  %s6 = ssub.s32 1, %s4
  %s7 = scalar_select 0, %s6, %s4
  $region1: #{tpu_custom_call.1} parent=0
    #allocation2 [shape = 'u8[65536]{0}', space=vmem, size = 0x10000, scoped, tag = 'input window, operand 0, single buffered']
    #allocation3 [shape = 's32[1]{0}', space=sflag, size = 0x4, scoped, tag = 'scoped memory for tpu_custom_call.1']
    #allocation4 [shape = 's32[1]{0}', space=sflag, size = 0x4, scoped, tag = 'scoped memory for tpu_custom_call.1']
    #allocation5 [shape = 'u8[1024]{0}', space=vmem, size = 0x400, scoped, tag = 'output window, operand 0, single buffered']
    %8 = vsyncpa [#allocation3], 0
    %9 = vsyncpa [#allocation4], 0
    // Predicated region
    $region2: #{tpu_custom_call.1} parent=1 // pred_check
      _
    $region3: #{tpu_custom_call.1} parent=1 // pred_check_branch
      %11 = sbr.rel (0) target = $region5
    $region4: #{tpu_custom_call.1} parent=1 // pred_region
      %s13 = ssub.s32 2048, 2048
      %14 = vsyncadd [#allocation3], %s13
      %s15 = sshll.u32 [#allocation2], 4
      %s16 = int_to_ptr.vmem [resolvable:$true] %s15
      %21 = dma.hbm_to_vmem [thread:$0]  %s0, 2048, %s16, [#allocation3], 256, 256, 16
    $region5: #{tpu_custom_call.1} parent=1 // pred_fallthru
      _
    // Predicated region
    $region6: #{tpu_custom_call.1} parent=1 // pred_check
      _
    $region7: #{tpu_custom_call.1} parent=1 // pred_check_branch
      %23 = sbr.rel (0) target = $region9
    $region8: #{tpu_custom_call.1} parent=1 // pred_region
      _
    $region9: #{tpu_custom_call.1} parent=1 // pred_fallthru
      _
    // Predicated region
    $region10: #{tpu_custom_call.1} parent=1 // pred_check
      _
    $region11: #{tpu_custom_call.1} parent=1 // pred_check_branch
      %25 = sbr.rel (0) target = $region13
    $region12: #{tpu_custom_call.1} parent=1 // pred_region
      _
    $region13: #{tpu_custom_call.1} parent=1 // pred_fallthru
      _
    // Predicated region
    $region14: #{tpu_custom_call.1} parent=1 // pred_check
      _
    $region15: #{tpu_custom_call.1} parent=1 // pred_check_branch
      %27 = sbr.rel (0) target = $region17
    $region16: #{tpu_custom_call.1} parent=1 // pred_region
      %28 = dma.done [#allocation3], 2048
    $region17: #{tpu_custom_call.1} parent=1 // pred_fallthru
      _
    %v29 = vld [vmem:[#allocation2] sm:$0xff]
    %v30 = vld [vmem:[#allocation2 + $0x8] sm:$0xff]
    %v31 = vld [vmem:[#allocation2 + $0x10] sm:$0xff]
    %v32 = vld [vmem:[#allocation2 + $0x18] sm:$0xff]
    %v33 = vld [vmem:[#allocation2 + $0x20] sm:$0xff]
    %v34 = vld [vmem:[#allocation2 + $0x28] sm:$0xff]
    %v35 = vld [vmem:[#allocation2 + $0x30] sm:$0xff]
    %v36 = vld [vmem:[#allocation2 + $0x38] sm:$0xff]
    %v37 = vld [vmem:[#allocation2 + $0x40] sm:$0xff]
    %v38 = vld [vmem:[#allocation2 + $0x48] sm:$0xff]
    %v39 = vld [vmem:[#allocation2 + $0x50] sm:$0xff]
    %v40 = vld [vmem:[#allocation2 + $0x58] sm:$0xff]
    %v41 = vld [vmem:[#allocation2 + $0x60] sm:$0xff]
    %v42 = vld [vmem:[#allocation2 + $0x68] sm:$0xff]
    %v43 = vld [vmem:[#allocation2 + $0x70] sm:$0xff]
    %v44 = vld [vmem:[#allocation2 + $0x78] sm:$0xff]
    %v45 = vadd.f32 %v29, %v30
    %46 = vadd.xlane.f32.xlu0 %v45
    %v47 = vpop.xlane.xlu0 %46
    %v48 = vadd.f32 %v31, %v32
    %49 = vadd.xlane.f32.xlu0 %v48
    %v50 = vpop.xlane.xlu0 %49
    %v51 = vadd.f32 %v33, %v34
    %52 = vadd.xlane.f32.xlu0 %v51
    %v53 = vpop.xlane.xlu0 %52
    %v54 = vadd.f32 %v35, %v36
    %55 = vadd.xlane.f32.xlu0 %v54
    %v56 = vpop.xlane.xlu0 %55
    %v57 = vadd.f32 %v37, %v38
    %58 = vadd.xlane.f32.xlu0 %v57
    %v59 = vpop.xlane.xlu0 %58
    %v60 = vadd.f32 %v39, %v40
    %61 = vadd.xlane.f32.xlu0 %v60
    %v62 = vpop.xlane.xlu0 %61
    %v63 = vadd.f32 %v41, %v42
    %64 = vadd.xlane.f32.xlu0 %v63
    %v65 = vpop.xlane.xlu0 %64
    %v66 = vadd.f32 %v43, %v44
    %67 = vadd.xlane.f32.xlu0 %v66
    %v68 = vpop.xlane.xlu0 %67
    %v69 = vmul.f32 %v47, 0.00390625
    %v70 = vmul.f32 %v50, 0.00390625
    %v71 = vmul.f32 %v53, 0.00390625
    %v72 = vmul.f32 %v56, 0.00390625
    %v73 = vmul.f32 %v59, 0.00390625
    %v74 = vmul.f32 %v62, 0.00390625
    %v75 = vmul.f32 %v65, 0.00390625
    %v76 = vmul.f32 %v68, 0.00390625
    %v77 = vmax.f32 %v29, %v30
    %78 = vmax.xlane.f32.xlu0 %v77
    %v79 = vpop.xlane.xlu0 %78
    %v80 = vmax.f32 %v31, %v32
    %81 = vmax.xlane.f32.xlu0 %v80
    %v82 = vpop.xlane.xlu0 %81
    %v83 = vmax.f32 %v33, %v34
    %84 = vmax.xlane.f32.xlu0 %v83
    %v85 = vpop.xlane.xlu0 %84
    %v86 = vmax.f32 %v35, %v36
    %87 = vmax.xlane.f32.xlu0 %v86
    %v88 = vpop.xlane.xlu0 %87
    %v89 = vmax.f32 %v37, %v38
    %90 = vmax.xlane.f32.xlu0 %v89
    %v91 = vpop.xlane.xlu0 %90
    %v92 = vmax.f32 %v39, %v40
    %93 = vmax.xlane.f32.xlu0 %v92
    %v94 = vpop.xlane.xlu0 %93
    %v95 = vmax.f32 %v41, %v42
    %96 = vmax.xlane.f32.xlu0 %v95
    %v97 = vpop.xlane.xlu0 %96
    %v98 = vmax.f32 %v43, %v44
    %99 = vmax.xlane.f32.xlu0 %v98
    %v100 = vpop.xlane.xlu0 %99
    %v109 = vlaneseq
    %v110 = vand.u32 %v109, 127
    %v111 = vlaneseq
    %v112 = vshrl.u32 %v111, 7
    %v113 = vsub.s32 %v110, %v112
    %v114 = vrot.slane %v69, %v113
    %v115 = vadd.s32 %v110, 4294967288
    %v116 = vlaneseq
    %v117 = vshrl.u32 %v116, 7
    %v118 = vsub.s32 %v115, %v117
    %v119 = vrot.slane %v70, %v118
    %vm120 = vcmask 130112
    %v121 = vsel %vm120, %v119, %v114
    %v122 = vadd.s32 %v110, 4294967280
    %v123 = vlaneseq
    %v124 = vshrl.u32 %v123, 7
    %v125 = vsub.s32 %v122, %v124
    %v126 = vrot.slane %v71, %v125
    %vm127 = vcmask 195712
    %v128 = vsel %vm127, %v126, %v121
    %v129 = vadd.s32 %v110, 4294967272
    %v130 = vlaneseq
    %v131 = vshrl.u32 %v130, 7
    %v132 = vsub.s32 %v129, %v131
    %v133 = vrot.slane %v72, %v132
    %vm134 = vcmask 261312
    %v135 = vsel %vm134, %v133, %v128
    %v136 = vlaneseq
    %v137 = vshrl.u32 %v136, 7
    %v138 = vsub.s32 %v110, %v137
    %v139 = vrot.slane %v73, %v138
    %v140 = vlaneseq
    %v141 = vshrl.u32 %v140, 7
    %v142 = vsub.s32 %v115, %v141
    %v143 = vrot.slane %v74, %v142
    %v144 = vsel %vm120, %v143, %v139
    %v145 = vlaneseq
    %v146 = vshrl.u32 %v145, 7
    %v147 = vsub.s32 %v122, %v146
    %v148 = vrot.slane %v75, %v147
    %v149 = vsel %vm127, %v148, %v144
    %v150 = vlaneseq
    %v151 = vshrl.u32 %v150, 7
    %v152 = vsub.s32 %v129, %v151
    %v153 = vrot.slane %v76, %v152
    %v154 = vsel %vm134, %v153, %v149
    %vm155 = vcmask 1041409
    %v156 = vsel %vm155, %v154, %v135
    %v166 = vlaneseq
    %v167 = vshrl.u32 %v166, 7
    %v168 = vsub.s32 %v110, %v167
    %v169 = vrot.slane %v79, %v168
    %v170 = vlaneseq
    %v171 = vshrl.u32 %v170, 7
    %v172 = vsub.s32 %v115, %v171
    %v173 = vrot.slane %v82, %v172
    %v174 = vsel %vm120, %v173, %v169
    %v175 = vlaneseq
    %v176 = vshrl.u32 %v175, 7
    %v177 = vsub.s32 %v122, %v176
    %v178 = vrot.slane %v85, %v177
    %v179 = vsel %vm127, %v178, %v174
    %v180 = vlaneseq
    %v181 = vshrl.u32 %v180, 7
    %v182 = vsub.s32 %v129, %v181
    %v183 = vrot.slane %v88, %v182
    %v184 = vsel %vm134, %v183, %v179
    %v185 = vlaneseq
    %v186 = vshrl.u32 %v185, 7
    %v187 = vsub.s32 %v110, %v186
    %v188 = vrot.slane %v91, %v187
    %v189 = vlaneseq
    %v190 = vshrl.u32 %v189, 7
    %v191 = vsub.s32 %v115, %v190
    %v192 = vrot.slane %v94, %v191
    %v193 = vsel %vm120, %v192, %v188
    %v194 = vlaneseq
    %v195 = vshrl.u32 %v194, 7
    %v196 = vsub.s32 %v122, %v195
    %v197 = vrot.slane %v97, %v196
    %v198 = vsel %vm127, %v197, %v193
    %v199 = vlaneseq
    %v200 = vshrl.u32 %v199, 7
    %v201 = vsub.s32 %v129, %v200
    %v202 = vrot.slane %v100, %v201
    %v203 = vsel %vm134, %v202, %v198
    %vm204 = vcmask 1043459
    %v205 = vsel %vm204, %v203, %v184
    %vm207 = vcmask 1041408
    %v208 = vsel %vm207, %v156, %v205
    %v209 = vld [vmem:[%s1] sm:$0xff]
    %v210 = vld [vmem:[%s1 + $0x8] sm:$0xff]
    %v211 = vld [vmem:[%s1 + $0x10] sm:$0xff]
    %v212 = vld [vmem:[%s1 + $0x18] sm:$0xff]
    %v213 = vld [vmem:[%s2] sm:$0x3]
    %vm214 = vcmask 261120
    %v216 = vsel %vm214, %v208, 0
    %218 = vmatprep.subr.mxu0 0.0
    %219 = vmatpush1.msra.mxu0 %v209
    %220 = vmatprep.subr.mxu0 0.0
    %221 = vmatpush1.msra.mxu0 %v210
    %222 = vmatprep.subr.mxu0 0.0
    %223 = vmatpush1.msra.mxu0 %v211
    %224 = vmatprep.subr.mxu0 0.0
    %225 = vmatpush1.msra.mxu0 %v212
    %226 = vmatprep.subr.mxu0 0.0
    %227 = vmatpush1.msra.mxu0 0.0
    %228 = vmatprep.subr.mxu0 0.0
    %229 = vmatpush1.msra.mxu0 0.0
    %230 = vmatprep.subr.mxu0 0.0
    %231 = vmatpush1.msra.mxu0 0.0
    %232 = vmatprep.subr.mxu0 0.0
    %233 = vmatpush1.msra.mxu0 0.0
    %234 = vmatprep.subr.mxu0 0.0
    %235 = vmatpush1.msra.mxu0 0.0
    %236 = vmatprep.subr.mxu0 0.0
    %237 = vmatpush1.msra.mxu0 0.0
    %238 = vmatprep.subr.mxu0 0.0
    %239 = vmatpush1.msra.mxu0 0.0
    %240 = vmatprep.subr.mxu0 0.0
    %241 = vmatpush1.msra.mxu0 0.0
    %242 = vmatprep.subr.mxu0 0.0
    %243 = vmatpush1.msra.mxu0 0.0
    %244 = vmatprep.subr.mxu0 0.0
    %245 = vmatpush1.msra.mxu0 0.0
    %246 = vmatprep.subr.mxu0 0.0
    %247 = vmatpush1.msra.mxu0 0.0
    %248 = vmatprep.subr.mxu0 0.0
    %249 = vmatpush1.msra.mxu0 0.0
    %250 = vmatprep.subr.mxu0 0.0
    %251 = vmatpush1.msra.mxu0 0.0
    %252 = vmatprep.subr.mxu0 0.0
    %253 = vmatpush1.msra.mxu0 0.0
    %254 = vmatprep.subr.mxu0 0.0
    %255 = vmatpush1.msra.mxu0 0.0
    %256 = vmatprep.subr.mxu0 0.0
    %257 = vmatpush1.msra.mxu0 0.0
    %258 = vmatprep.subr.mxu0 0.0
    %259 = vmatpush1.msra.mxu0 0.0
    %260 = vmatprep.subr.mxu0 0.0
    %261 = vmatpush1.msra.mxu0 0.0
    %262 = vmatprep.subr.mxu0 0.0
    %263 = vmatpush1.msra.mxu0 0.0
    %264 = vmatprep.subr.mxu0 0.0
    %265 = vmatpush1.msra.mxu0 0.0
    %266 = vmatprep.subr.mxu0 0.0
    %267 = vmatpush1.msra.mxu0 0.0
    %268 = vmatprep.subr.mxu0 0.0
    %269 = vmatpush1.msra.mxu0 0.0
    %270 = vmatprep.subr.mxu0 0.0
    %271 = vmatpush1.msra.mxu0 0.0
    %272 = vmatprep.subr.mxu0 0.0
    %273 = vmatpush1.msra.mxu0 0.0
    %274 = vmatprep.subr.mxu0 0.0
    %275 = vmatpush1.msra.mxu0 0.0
    %276 = vmatprep.subr.mxu0 0.0
    %277 = vmatpush1.msra.mxu0 0.0
    %278 = vmatprep.subr.mxu0 0.0
    %279 = vmatpush1.msra.mxu0 0.0
    %280 = vmatprep.subr.mxu0 0.0
    %281 = vmatpush1.msra.mxu0 0.0
    %282 = vmatprep.mubr.f32.mxu0 0.0
    %283 = vmatmul.mubr.f32.gmra.mrb[0].mxu0 %v216
    %v284 = vpop.f32.mrb[0].mxu0
    %v285 = vadd.f32 0.0, %v284
    %v286 = vpop.f32.mrb[0].mxu0
    %287 = vdwg.mxu0
    %v288 = vmax.f32 %v285, 0.0
    %vm289 = vcmask 15360
    %v291 = vsel %vm289, %v288, 0
    %v294 = vsel %vm207, %v213, 0
    %296 = vmatprep.subr.mxu0 0.0
    %297 = vmatpush1.msra.mxu0 %v294
    %298 = vmatprep.subr.mxu0 0.0
    %299 = vmatpush1.msra.mxu0 0.0
    %300 = vmatprep.subr.mxu0 0.0
    %301 = vmatpush1.msra.mxu0 0.0
    %302 = vmatprep.subr.mxu0 0.0
    %303 = vmatpush1.msra.mxu0 0.0
    %304 = vmatprep.subr.mxu0 0.0
    %305 = vmatpush1.msra.mxu0 0.0
    %306 = vmatprep.subr.mxu0 0.0
    %307 = vmatpush1.msra.mxu0 0.0
    %308 = vmatprep.subr.mxu0 0.0
    %309 = vmatpush1.msra.mxu0 0.0
    %310 = vmatprep.subr.mxu0 0.0
    %311 = vmatpush1.msra.mxu0 0.0
    %312 = vmatprep.subr.mxu0 0.0
    %313 = vmatpush1.msra.mxu0 0.0
    %314 = vmatprep.subr.mxu0 0.0
    %315 = vmatpush1.msra.mxu0 0.0
    %316 = vmatprep.subr.mxu0 0.0
    %317 = vmatpush1.msra.mxu0 0.0
    %318 = vmatprep.subr.mxu0 0.0
    %319 = vmatpush1.msra.mxu0 0.0
    %320 = vmatprep.subr.mxu0 0.0
    %321 = vmatpush1.msra.mxu0 0.0
    %322 = vmatprep.subr.mxu0 0.0
    %323 = vmatpush1.msra.mxu0 0.0
    %324 = vmatprep.subr.mxu0 0.0
    %325 = vmatpush1.msra.mxu0 0.0
    %326 = vmatprep.subr.mxu0 0.0
    %327 = vmatpush1.msra.mxu0 0.0
    %328 = vmatprep.subr.mxu0 0.0
    %329 = vmatpush1.msra.mxu0 0.0
    %330 = vmatprep.subr.mxu0 0.0
    %331 = vmatpush1.msra.mxu0 0.0
    %332 = vmatprep.subr.mxu0 0.0
    %333 = vmatpush1.msra.mxu0 0.0
    %334 = vmatprep.subr.mxu0 0.0
    %335 = vmatpush1.msra.mxu0 0.0
    %336 = vmatprep.subr.mxu0 0.0
    %337 = vmatpush1.msra.mxu0 0.0
    %338 = vmatprep.subr.mxu0 0.0
    %339 = vmatpush1.msra.mxu0 0.0
    %340 = vmatprep.subr.mxu0 0.0
    %341 = vmatpush1.msra.mxu0 0.0
    %342 = vmatprep.subr.mxu0 0.0
    %343 = vmatpush1.msra.mxu0 0.0
    %344 = vmatprep.subr.mxu0 0.0
    %345 = vmatpush1.msra.mxu0 0.0
    %346 = vmatprep.subr.mxu0 0.0
    %347 = vmatpush1.msra.mxu0 0.0
    %348 = vmatprep.subr.mxu0 0.0
    %349 = vmatpush1.msra.mxu0 0.0
    %350 = vmatprep.subr.mxu0 0.0
    %351 = vmatpush1.msra.mxu0 0.0
    %352 = vmatprep.subr.mxu0 0.0
    %353 = vmatpush1.msra.mxu0 0.0
    %354 = vmatprep.subr.mxu0 0.0
    %355 = vmatpush1.msra.mxu0 0.0
    %356 = vmatprep.subr.mxu0 0.0
    %357 = vmatpush1.msra.mxu0 0.0
    %358 = vmatprep.subr.mxu0 0.0
    %359 = vmatpush1.msra.mxu0 0.0
    %360 = vmatprep.mubr.f32.mxu0 0.0
    %361 = vmatmul.mubr.f32.gmra.mrb[0].mxu0 %v291
    %v362 = vpop.f32.mrb[0].mxu0
    %v363 = vadd.f32 0.0, %v362
    %v364 = vpop.f32.mrb[0].mxu0
    %365 = vdwg.mxu0
    %v367 = vrot.slane %v363, 2
    %v369 = vadd.f32 %v363, %v367
    %v370 = vxor.u32 %v369, 2147483648
    %v371 = vmul.f32 %v370, 1.442695
    %v372 = vpow.pop %v371
    %v373 = vadd.f32 %v372, 1.0
    %v374 = vrcp.pop %v373
    %v375 = vmul.f32 1.0, %v374
    %vm376 = vcmask 254976
    %377 = vst.msk [vmem:[#allocation5] sm:$0x3] %vm376, %v375
    // Predicated region
    $region18: #{tpu_custom_call.1} parent=1 // pred_check
      _
    $region19: #{tpu_custom_call.1} parent=1 // pred_check_branch
      %379 = sbr.rel (0) target = $region21
    $region20: #{tpu_custom_call.1} parent=1 // pred_region
      %s381 = ssub.s32 32, 32
      %382 = vsyncadd [#allocation4], %s381
      %s384 = sshll.u32 [#allocation5], 4
      %s385 = int_to_ptr.vmem [resolvable:$true] %s384
      %387 = dma.vmem_to_hbm [thread:$0]  %s385, 32, %s3, [#allocation4]
    $region21: #{tpu_custom_call.1} parent=1 // pred_fallthru
      _
    // Predicated region
    $region22: #{tpu_custom_call.1} parent=1 // pred_check
      _
    $region23: #{tpu_custom_call.1} parent=1 // pred_check_branch
      %389 = sbr.rel (0) target = $region25
    $region24: #{tpu_custom_call.1} parent=1 // pred_region
      %390 = dma.done [#allocation4], 32
    $region25: #{tpu_custom_call.1} parent=1 // pred_fallthru
      _
    %391 = vsyncpa [#allocation3], 1
    %392 = vsyncpa [#allocation4], 1

</llo_original>
